<compile_context>
chip_gen: v7x
topology: tpu7x:2x2x1
jax: 0.10.0
libtpu: 0.0.40
codegen_flags: <defaults>
</compile_context>

<pallas_src>
import functools

import jax
import jax.numpy as jnp
from jax.experimental import pallas as pl
from jax.experimental.pallas import tpu as pltpu


def _mlp_kernel(x_ref, w1_ref, b1_ref, w2_ref, b2_ref, w3_ref, b3_ref, o_ref,
                *, bf16_tanh: bool = False):
    def act(z):
        if bf16_tanh:  # v6e/v7x only: EUP has native bf16 (~2x transcendental rate)
            return jnp.tanh(z.astype(jnp.bfloat16)).astype(jnp.float32)
        return jnp.tanh(z)

    x = x_ref[...]                                        # (TB, IN), natural layout

    # layer 1: W1' @ x.T  (trans-B dot_general; contraction over IN).  Result is
    # (H1, TB) -> batch lands on the lane axis for all downstream math.
    z1 = jax.lax.dot_general(w1_ref[...], x, (((1,), (1,)), ((), ())),
                             preferred_element_type=jnp.float32) + b1_ref[...]
    t1 = act(z1)                                          # (H1, TB)

    # layer 2: (H2, H1) @ (H1, TB)
    z2 = jnp.dot(w2_ref[...], t1,
                 preferred_element_type=jnp.float32) + b2_ref[...]
    t2 = act(z2)                                          # (H2, TB)

    # layer 3 on the (near-idle) MXU: (C, H2) @ (H2, TB); keeps the cross-sublane
    # reduce off the XLU, which already carries the layer-1 transpose.
    z3 = jnp.dot(w3_ref[...], t2,
                 preferred_element_type=jnp.float32) + b3_ref[...]

    # sigmoid(z)*2 == tanh(z/2)+1; the /2 is pre-folded into w3'/b3'.
    o_ref[...] = act(z3) + 1.0


def fold_params(params):
    """One-time transform (cache the result; do NOT re-fold every call).

    Folds the sigmoid affine pieces into the weights so each layer is a single
    tanh(W'x + b'):
        sigmoid(u)      = 0.5*(tanh(u/2) + 1)
        sigmoid(u) * 2  =      tanh(u/2) + 1
    """
    w1, b1 = params["w1"], params["b1"]
    w2, b2 = params["w2"], params["b2"]
    w3, b3 = params["w3"], params["b3"]
    return {
        "w1": 0.5 * w1,
        "b1": 0.5 * b1,
        "w2": 0.25 * w2,
        "b2": 0.5 * b2 + 0.25 * jnp.sum(w2, axis=1, keepdims=True),
        "w3": 0.25 * w3,
        "b3": 0.5 * b3 + 0.25 * jnp.sum(w3, axis=1, keepdims=True),
    }


def _choose_grid(batch, tb_max=8192):
    """Pick (tile_batch, n_tiles).

    * batch <= 256: one exact tile (no padding, no masked work, no extra ops).
    * otherwise: an even number of tiles (keeps both v7x TensorCores busy),
      each a multiple of 128 lanes and <= tb_max so per-grid-step overhead
      (~600 cycles) stays <~10% of the EUP-bound compute.
    """
    if batch <= 256:
        return batch, 1
    n = 2
    while pl.cdiv(batch, n) > tb_max:
        n += 2
    tb = ((pl.cdiv(batch, n) + 127) // 128) * 128
    return tb, pl.cdiv(batch, tb)


def mlp_error_est(x, folded, *, tb_max=8192, use_bf16_tanh=False):
    """Forward pass of MLP_error_est.

    x: (batch, ...) -> flattened to (batch, input_size).
    folded: output of fold_params() (PyTorch-layout (out, in) weights,
            (out, 1) biases, pre-folded).  Returns (batch, num_classes).
    """
    batch = x.shape[0]
    x2 = x.reshape(batch, -1).astype(jnp.float32)         # x.view(x.size(0), -1)
    in_dim = x2.shape[1]
    w1, b1 = folded["w1"], folded["b1"]
    w2, b2 = folded["w2"], folded["b2"]
    w3, b3 = folded["w3"], folded["b3"]
    h1_dim, h2_dim, num_classes = w1.shape[0], w2.shape[0], w3.shape[0]

    tb, n_tiles = _choose_grid(batch, tb_max)

    n_param = int(sum(int(p.size) for p in folded.values()))
    cost = pl.CostEstimate(
        flops=2 * batch * (in_dim * h1_dim + h1_dim * h2_dim + h2_dim * num_classes),
        transcendentals=batch * (h1_dim + h2_dim + num_classes),
        bytes_accessed=4 * (batch * (in_dim + num_classes) + n_param),
    )

    out = pl.pallas_call(
        functools.partial(_mlp_kernel, bf16_tanh=use_bf16_tanh),
        out_shape=jax.ShapeDtypeStruct((num_classes, batch), jnp.float32),
        grid=(n_tiles,),
        in_specs=[
            pl.BlockSpec((tb, in_dim), lambda i: (i, 0)),      # x tile (streamed)
            pl.BlockSpec(w1.shape, lambda i: (0, 0)),          # params stay resident
            pl.BlockSpec(b1.shape, lambda i: (0, 0)),
            pl.BlockSpec(w2.shape, lambda i: (0, 0)),
            pl.BlockSpec(b2.shape, lambda i: (0, 0)),
            pl.BlockSpec(w3.shape, lambda i: (0, 0)),
            pl.BlockSpec(b3.shape, lambda i: (0, 0)),
        ],
        out_specs=pl.BlockSpec((num_classes, tb), lambda i: (0, i)),
        compiler_params=pltpu.CompilerParams(
            dimension_semantics=("parallel",),    # shards tiles across v7x TCs
            vmem_limit_bytes=32 * 1024 * 1024,    # safe on v5e/v6e/v7x at tb<=8192
        ),
        cost_estimate=cost,
    )(x2, w1, b1, w2, b2, w3, b3)

    # (num_classes, batch) -> (batch, num_classes); trivial for num_classes == 1.
    return out.T


# ---------------------------------------------------------------------------
# Reference / parameter helpers (unfolded, PyTorch semantics)
# ---------------------------------------------------------------------------
def init_params(key, input_size=11, num_classes=1):
    """PyTorch nn.Linear default init U(-1/sqrt(fan_in), 1/sqrt(fan_in)).
    Weights stored PyTorch-style (out, in); biases as (out, 1)."""
    dims = [(input_size, input_size * 2),
            (input_size * 2, input_size * 4),
            (input_size * 4, num_classes)]
    params = {}
    for i, (fan_in, fan_out) in enumerate(dims, start=1):
        key, kw, kb = jax.random.split(key, 3)
        bound = 1.0 / float(fan_in) ** 0.5
        params[f"w{i}"] = jax.random.uniform(
            kw, (fan_out, fan_in), jnp.float32, -bound, bound)
        params[f"b{i}"] = jax.random.uniform(
            kb, (fan_out, 1), jnp.float32, -bound, bound)
    return params


def mlp_reference(x, params):
    x = x.reshape(x.shape[0], -1)
    h = jax.nn.sigmoid(x @ params["w1"].T + params["b1"].T)
    h = jax.nn.sigmoid(h @ params["w2"].T + params["b2"].T)
    return jax.nn.sigmoid(h @ params["w3"].T + params["b3"].T) * 2.0


if __name__ == "__main__":
    key = jax.random.PRNGKey(0)
    kx, kx2, kp = jax.random.split(key, 3)

    input_size, num_classes = 11, 1
    params = init_params(kp, input_size=input_size, num_classes=num_classes)
    folded = fold_params(params)   # fold once, reuse across calls

    # small single-tile batch
    batch = 8
    x = jax.random.normal(kx, (batch, input_size), jnp.float32)
    out = jax.block_until_ready(mlp_error_est(x, folded))
    ref = mlp_reference(x, params)
    assert out.shape == (batch, num_classes)
    assert jnp.allclose(out, ref, atol=1e-5, rtol=1e-5)

    # multi-tile path (even grid, partial trailing block)
    batch2 = 300
    x2 = jax.random.normal(kx2, (batch2, input_size), jnp.float32)
    out2 = jax.block_until_ready(mlp_error_est(x2, folded))
    ref2 = mlp_reference(x2, params)
    assert out2.shape == (batch2, num_classes)
    assert jnp.allclose(out2, ref2, atol=1e-5, rtol=1e-5)

    print("KERNEL_OK")
</pallas_src>

<mosaic_0001>
module attributes {stable_mosaic.version = 11 : i64} {
  func.func @_mlp_kernel(%arg0: i32, %arg1: memref<8x11xf32, #tpu.memory_space<vmem>>, %arg2: memref<22x11xf32, #tpu.memory_space<vmem>>, %arg3: memref<22x1xf32, #tpu.memory_space<vmem>>, %arg4: memref<44x22xf32, #tpu.memory_space<vmem>>, %arg5: memref<44x1xf32, #tpu.memory_space<vmem>>, %arg6: memref<1x44xf32, #tpu.memory_space<vmem>>, %arg7: memref<1x1xf32, #tpu.memory_space<vmem>>, %arg8: memref<1x8xf32, #tpu.memory_space<vmem>>) attributes {dimension_semantics = [#tpu.dimension_semantics<parallel>], iteration_bounds = array<i64: 1>, scalar_prefetch = 0 : i64, scratch_operands = 0 : i64, tpu.core_type = #tpu.core_type<tc>, window_params = [{transform_indices = @transform_0, window_bounds = array<i64: 8, 11>}, {pipeline_mode = #tpu.pipeline_mode<synchronous>, transform_indices = @transform_1, window_bounds = array<i64: 22, 11>}, {pipeline_mode = #tpu.pipeline_mode<synchronous>, transform_indices = @transform_2, window_bounds = array<i64: 22, 1>}, {pipeline_mode = #tpu.pipeline_mode<synchronous>, transform_indices = @transform_3, window_bounds = array<i64: 44, 22>}, {pipeline_mode = #tpu.pipeline_mode<synchronous>, transform_indices = @transform_4, window_bounds = array<i64: 44, 1>}, {pipeline_mode = #tpu.pipeline_mode<synchronous>, transform_indices = @transform_5, window_bounds = array<i64: 1, 44>}, {pipeline_mode = #tpu.pipeline_mode<synchronous>, transform_indices = @transform_6, window_bounds = array<i64: 1, 1>}, {transform_indices = @transform_7, window_bounds = array<i64: 1, 8>}]} {
    %c0 = arith.constant 0 : index
    %c0_0 = arith.constant 0 : index
    %0 = vector.load %arg1[%c0, %c0_0] : memref<8x11xf32, #tpu.memory_space<vmem>>, vector<8x11xf32>
    %c0_1 = arith.constant 0 : index
    %c0_2 = arith.constant 0 : index
    %1 = vector.load %arg2[%c0_1, %c0_2] : memref<22x11xf32, #tpu.memory_space<vmem>>, vector<22x11xf32>
    %cst = arith.constant dense<0.000000e+00> : vector<22x8xf32>
    %2 = tpu.matmul %1, %0, %cst {dimension_numbers = #tpu.dot_dimension_numbers<[1], [1], [0], [0], [0, 0, 1, 0], [], []>} : vector<22x11xf32>, vector<8x11xf32>, vector<22x8xf32> -> vector<22x8xf32>
    %c0_3 = arith.constant 0 : index
    %c0_4 = arith.constant 0 : index
    %3 = vector.load %arg3[%c0_3, %c0_4] : memref<22x1xf32, #tpu.memory_space<vmem>>, vector<22x1xf32>
    %4 = vector.broadcast %3 : vector<22x1xf32> to vector<22x8xf32>
    %5 = arith.addf %2, %4 : vector<22x8xf32>
    %6 = math.tanh %5 : vector<22x8xf32>
    %c0_5 = arith.constant 0 : index
    %c0_6 = arith.constant 0 : index
    %7 = vector.load %arg4[%c0_5, %c0_6] : memref<44x22xf32, #tpu.memory_space<vmem>>, vector<44x22xf32>
    %cst_7 = arith.constant dense<0.000000e+00> : vector<44x8xf32>
    %8 = tpu.matmul %7, %6, %cst_7 {dimension_numbers = #tpu.dot_dimension_numbers<[1], [0], [0], [1], [0, 0, 1, 1], [], []>} : vector<44x22xf32>, vector<22x8xf32>, vector<44x8xf32> -> vector<44x8xf32>
    %c0_8 = arith.constant 0 : index
    %c0_9 = arith.constant 0 : index
    %9 = vector.load %arg5[%c0_8, %c0_9] : memref<44x1xf32, #tpu.memory_space<vmem>>, vector<44x1xf32>
    %10 = vector.broadcast %9 : vector<44x1xf32> to vector<44x8xf32>
    %11 = arith.addf %8, %10 : vector<44x8xf32>
    %12 = math.tanh %11 : vector<44x8xf32>
    %c0_10 = arith.constant 0 : index
    %c0_11 = arith.constant 0 : index
    %13 = vector.load %arg6[%c0_10, %c0_11] : memref<1x44xf32, #tpu.memory_space<vmem>>, vector<1x44xf32>
    %cst_12 = arith.constant dense<0.000000e+00> : vector<1x8xf32>
    %14 = tpu.matmul %13, %12, %cst_12 {dimension_numbers = #tpu.dot_dimension_numbers<[1], [0], [0], [1], [0, 0, 1, 1], [], []>} : vector<1x44xf32>, vector<44x8xf32>, vector<1x8xf32> -> vector<1x8xf32>
    %c0_13 = arith.constant 0 : index
    %c0_14 = arith.constant 0 : index
    %15 = vector.load %arg7[%c0_13, %c0_14] : memref<1x1xf32, #tpu.memory_space<vmem>>, vector<1x1xf32>
    %16 = vector.broadcast %15 : vector<1x1xf32> to vector<1x8xf32>
    %17 = arith.addf %14, %16 : vector<1x8xf32>
    %18 = math.tanh %17 : vector<1x8xf32>
    %cst_15 = arith.constant 1.000000e+00 : f32
    %19 = vector.broadcast %cst_15 : f32 to vector<1x8xf32>
    %20 = arith.addf %18, %19 : vector<1x8xf32>
    %c0_16 = arith.constant 0 : index
    %c0_17 = arith.constant 0 : index
    %21 = vector.load %arg8[%c0_16, %c0_17] : memref<1x8xf32, #tpu.memory_space<vmem>>, vector<1x8xf32>
    tpu.vector_store %arg8[%c0_16, %c0_17], %20 {strides = array<i32>} : memref<1x8xf32, #tpu.memory_space<vmem>>, vector<1x8xf32>,
    return
  }
  func.func @transform_0(%arg0: i32) -> (i32, i32) {
    %c0_i32 = arith.constant 0 : i32
    %c0_i32_0 = arith.constant 0 : i32
    return %arg0, %c0_i32 : i32, i32
  }
  func.func @transform_1(%arg0: i32) -> (i32, i32) {
    %c0_i32 = arith.constant 0 : i32
    %c0_i32_0 = arith.constant 0 : i32
    %c0_i32_1 = arith.constant 0 : i32
    return %c0_i32, %c0_i32_0 : i32, i32
  }
  func.func @transform_2(%arg0: i32) -> (i32, i32) {
    %c0_i32 = arith.constant 0 : i32
    %c0_i32_0 = arith.constant 0 : i32
    %c0_i32_1 = arith.constant 0 : i32
    return %c0_i32, %c0_i32_0 : i32, i32
  }
  func.func @transform_3(%arg0: i32) -> (i32, i32) {
    %c0_i32 = arith.constant 0 : i32
    %c0_i32_0 = arith.constant 0 : i32
    %c0_i32_1 = arith.constant 0 : i32
    return %c0_i32, %c0_i32_0 : i32, i32
  }
  func.func @transform_4(%arg0: i32) -> (i32, i32) {
    %c0_i32 = arith.constant 0 : i32
    %c0_i32_0 = arith.constant 0 : i32
    %c0_i32_1 = arith.constant 0 : i32
    return %c0_i32, %c0_i32_0 : i32, i32
  }
  func.func @transform_5(%arg0: i32) -> (i32, i32) {
    %c0_i32 = arith.constant 0 : i32
    %c0_i32_0 = arith.constant 0 : i32
    %c0_i32_1 = arith.constant 0 : i32
    return %c0_i32, %c0_i32_0 : i32, i32
  }
  func.func @transform_6(%arg0: i32) -> (i32, i32) {
    %c0_i32 = arith.constant 0 : i32
    %c0_i32_0 = arith.constant 0 : i32
    %c0_i32_1 = arith.constant 0 : i32
    return %c0_i32, %c0_i32_0 : i32, i32
  }
  func.func @transform_7(%arg0: i32) -> (i32, i32) {
    %c0_i32 = arith.constant 0 : i32
    %c0_i32_0 = arith.constant 0 : i32
    return %c0_i32, %arg0 : i32, i32
  }
}

</mosaic_0001>

<llo_original>
// kernel: tpu_custom_call.1
$region0: #{tpu_custom_call.1}
  #allocation0 [shape = 'u32[]', space=smem, size = 0x4, offset = 0x4, fixed_abs, tag = 'smem constant byte address 0x4 - core index']
  #allocation1 [shape = 'u32[144,128]{1,0:T(1,128)}', space=vmem, size = 0x12000, scoped, tag = 'internal scratch']
  #allocation2 [shape = 'f32[1,1]{1,0:T(1,128)S(1)}', space=vmem, size = 0x200, scoped, tag = 'scoped memory for tpu_custom_call.1']
  %s0 = inlined_call_operand.vmem [shape: f32[8,11], index: 0, kind: input, shape index: {}]
  %s1 = inlined_call_operand.vmem [shape: f32[22,11], index: 1, kind: input, shape index: {}]
  %s2 = inlined_call_operand.vmem [shape: f32[22,1], index: 2, kind: input, shape index: {}]
  %s3 = inlined_call_operand.vmem [shape: f32[44,22], index: 3, kind: input, shape index: {}]
  %s4 = inlined_call_operand.vmem [shape: f32[44,1], index: 4, kind: input, shape index: {}]
  %s5 = inlined_call_operand.vmem [shape: f32[1,44], index: 5, kind: input, shape index: {}]
  %s6 = inlined_call_operand.<no memory space> [shape: f32[1,1], index: 6, kind: input, shape index: {}]
  %s7 = inlined_call_operand.hbm [shape: f32[1,8], index: 7, kind: output, shape index: {}]
  %s8 = sld [smem:[#allocation0]]
  $region38: #{tpu_custom_call.1} parent=0
    _
  %s10 = ssub.s32 1, %s8
  %s11 = scalar_select 0, %s10, %s8
  %v12 = vstv %s6
  %13 = vst [vmem:[#allocation2] sm:$0x1] %v12
  $region1: #{tpu_custom_call.1} parent=0
    #allocation3 [shape = 'u8[512]{0}', space=vmem, size = 0x400, scoped, tag = 'output window, operand 0, single buffered']
    #allocation4 [shape = 's32[1]{0}', space=sflag, size = 0x4, scoped, tag = 'scoped memory for tpu_custom_call.1']
    %14 = vsyncpa [#allocation4], 0
    // Predicated region
    $region2: #{tpu_custom_call.1} parent=1 // pred_check
      _
    $region3: #{tpu_custom_call.1} parent=1 // pred_check_branch
      %16 = sbr.rel (0) target = $region5
    $region4: #{tpu_custom_call.1} parent=1 // pred_region
      _
    $region5: #{tpu_custom_call.1} parent=1 // pred_fallthru
      _
    // Predicated region
    $region6: #{tpu_custom_call.1} parent=1 // pred_check
      _
    $region7: #{tpu_custom_call.1} parent=1 // pred_check_branch
      %18 = sbr.rel (0) target = $region9
    $region8: #{tpu_custom_call.1} parent=1 // pred_region
      _
    $region9: #{tpu_custom_call.1} parent=1 // pred_fallthru
      _
    // Predicated region
    $region10: #{tpu_custom_call.1} parent=1 // pred_check
      _
    $region11: #{tpu_custom_call.1} parent=1 // pred_check_branch
      %20 = sbr.rel (0) target = $region13
    $region12: #{tpu_custom_call.1} parent=1 // pred_region
      _
    $region13: #{tpu_custom_call.1} parent=1 // pred_fallthru
      _
    // Predicated region
    $region14: #{tpu_custom_call.1} parent=1 // pred_check
      _
    $region15: #{tpu_custom_call.1} parent=1 // pred_check_branch
      %22 = sbr.rel (0) target = $region17
    $region16: #{tpu_custom_call.1} parent=1 // pred_region
      _
    $region17: #{tpu_custom_call.1} parent=1 // pred_fallthru
      _
    // Predicated region
    $region18: #{tpu_custom_call.1} parent=1 // pred_check
      _
    $region19: #{tpu_custom_call.1} parent=1 // pred_check_branch
      %24 = sbr.rel (0) target = $region21
    $region20: #{tpu_custom_call.1} parent=1 // pred_region
      _
    $region21: #{tpu_custom_call.1} parent=1 // pred_fallthru
      _
    // Predicated region
    $region22: #{tpu_custom_call.1} parent=1 // pred_check
      _
    $region23: #{tpu_custom_call.1} parent=1 // pred_check_branch
      %26 = sbr.rel (0) target = $region25
    $region24: #{tpu_custom_call.1} parent=1 // pred_region
      _
    $region25: #{tpu_custom_call.1} parent=1 // pred_fallthru
      _
    // Predicated region
    $region26: #{tpu_custom_call.1} parent=1 // pred_check
      _
    $region27: #{tpu_custom_call.1} parent=1 // pred_check_branch
      %28 = sbr.rel (0) target = $region29
    $region28: #{tpu_custom_call.1} parent=1 // pred_region
      _
    $region29: #{tpu_custom_call.1} parent=1 // pred_fallthru
      _
    %v29 = vld [vmem:[%s0] sm:$0xff]
    %v30 = vld [vmem:[%s1] sm:$0xff]
    %v31 = vld [vmem:[%s1 + $0x8] sm:$0xff]
    %v32 = vld [vmem:[%s1 + $0x10] sm:$0x3f]
    %v33 = vld [vmem:[%s2] sm:$0xff]
    %v34 = vld [vmem:[%s2 + $0x8] sm:$0xff]
    %v35 = vld [vmem:[%s2 + $0x10] sm:$0x3f]
    %37 = vset.pattern.permute.xlu0 0
    %38 = vperm.xlu0 %37, %v33
    %v39 = vpop.permute.xlu0 %38
    %42 = vset.pattern.permute.xlu0 0
    %43 = vperm.xlu0 %42, %v34
    %v44 = vpop.permute.xlu0 %43
    %47 = vset.pattern.permute.xlu0 0
    %48 = vperm.xlu0 %47, %v35
    %v49 = vpop.permute.xlu0 %48
    %vm51 = vcmask 89088
    %v53 = vsel %vm51, %v30, 0
    %v56 = vsel %vm51, %v31, 0
    %v59 = vsel %vm51, %v32, 0
    %v62 = vsel %vm51, %v29, 0
    %64 = vmatprep.subr.mxu0 0.0
    %65 = vmatpush1.xpose.msra.mxu0 %v62
    %66 = vmatprep.subr.mxu0 0.0
    %67 = vmatpush1.xpose.msra.mxu0 0.0
    %68 = vmatprep.subr.mxu0 0.0
    %69 = vmatpush1.xpose.msra.mxu0 0.0
    %70 = vmatprep.subr.mxu0 0.0
    %71 = vmatpush1.xpose.msra.mxu0 0.0
    %72 = vmatprep.subr.mxu0 0.0
    %73 = vmatpush1.xpose.msra.mxu0 0.0
    %74 = vmatprep.subr.mxu0 0.0
    %75 = vmatpush1.xpose.msra.mxu0 0.0
    %76 = vmatprep.subr.mxu0 0.0
    %77 = vmatpush1.xpose.msra.mxu0 0.0
    %78 = vmatprep.subr.mxu0 0.0
    %79 = vmatpush1.xpose.msra.mxu0 0.0
    %80 = vmatprep.subr.mxu0 0.0
    %81 = vmatpush1.xpose.msra.mxu0 0.0
    %82 = vmatprep.subr.mxu0 0.0
    %83 = vmatpush1.xpose.msra.mxu0 0.0
    %84 = vmatprep.subr.mxu0 0.0
    %85 = vmatpush1.xpose.msra.mxu0 0.0
    %86 = vmatprep.subr.mxu0 0.0
    %87 = vmatpush1.xpose.msra.mxu0 0.0
    %88 = vmatprep.subr.mxu0 0.0
    %89 = vmatpush1.xpose.msra.mxu0 0.0
    %90 = vmatprep.subr.mxu0 0.0
    %91 = vmatpush1.xpose.msra.mxu0 0.0
    %92 = vmatprep.subr.mxu0 0.0
    %93 = vmatpush1.xpose.msra.mxu0 0.0
    %94 = vmatprep.subr.mxu0 0.0
    %95 = vmatpush1.xpose.msra.mxu0 0.0
    %96 = vmatprep.subr.mxu0 0.0
    %97 = vmatpush1.xpose.msra.mxu0 0.0
    %98 = vmatprep.subr.mxu0 0.0
    %99 = vmatpush1.xpose.msra.mxu0 0.0
    %100 = vmatprep.subr.mxu0 0.0
    %101 = vmatpush1.xpose.msra.mxu0 0.0
    %102 = vmatprep.subr.mxu0 0.0
    %103 = vmatpush1.xpose.msra.mxu0 0.0
    %104 = vmatprep.subr.mxu0 0.0
    %105 = vmatpush1.xpose.msra.mxu0 0.0
    %106 = vmatprep.subr.mxu0 0.0
    %107 = vmatpush1.xpose.msra.mxu0 0.0
    %108 = vmatprep.subr.mxu0 0.0
    %109 = vmatpush1.xpose.msra.mxu0 0.0
    %110 = vmatprep.subr.mxu0 0.0
    %111 = vmatpush1.xpose.msra.mxu0 0.0
    %112 = vmatprep.subr.mxu0 0.0
    %113 = vmatpush1.xpose.msra.mxu0 0.0
    %114 = vmatprep.subr.mxu0 0.0
    %115 = vmatpush1.xpose.msra.mxu0 0.0
    %116 = vmatprep.subr.mxu0 0.0
    %117 = vmatpush1.xpose.msra.mxu0 0.0
    %118 = vmatprep.subr.mxu0 0.0
    %119 = vmatpush1.xpose.msra.mxu0 0.0
    %120 = vmatprep.subr.mxu0 0.0
    %121 = vmatpush1.xpose.msra.mxu0 0.0
    %122 = vmatprep.subr.mxu0 0.0
    %123 = vmatpush1.xpose.msra.mxu0 0.0
    %124 = vmatprep.subr.mxu0 0.0
    %125 = vmatpush1.xpose.msra.mxu0 0.0
    %126 = vmatprep.subr.mxu0 0.0
    %127 = vmatpush1.xpose.msra.mxu0 0.0
    %128 = vmatprep.mubr.f32.mxu0 0.0
    %129 = vmatmul.mubr.f32.gmra.mrb[0].mxu0 %v53
    %v130 = vpop.f32.mrb[0].mxu0
    %v131 = vadd.f32 %v39, %v130
    %v132 = vpop.f32.mrb[0].mxu0
    %133 = vmatprep.mubr.f32.mxu0 0.0
    %134 = vmatmul.mubr.f32.gmra.mrb[0].mxu0 %v56
    %v135 = vpop.f32.mrb[0].mxu0
    %v136 = vadd.f32 %v44, %v135
    %v137 = vpop.f32.mrb[0].mxu0
    %138 = vmatprep.mubr.f32.mxu0 0.0
    %139 = vmatmul.mubr.f32.gmra.mrb[0].mxu0 %v59
    %v140 = vpop.f32.mrb[0].mxu0
    %v141 = vadd.f32 %v49, %v140
    %v142 = vpop.f32.mrb[0].mxu0
    %143 = vdwg.mxu0
    %v144 = vtanh.pop %v131
    %v145 = vtanh.pop %v136
    %v146 = vtanh.pop %v141
    %v147 = vld [vmem:[%s3] sm:$0xff]
    %v148 = vld [vmem:[%s3 + $0x8] sm:$0xff]
    %v149 = vld [vmem:[%s3 + $0x10] sm:$0xff]
    %v150 = vld [vmem:[%s3 + $0x18] sm:$0xff]
    %v151 = vld [vmem:[%s3 + $0x20] sm:$0xff]
    %v152 = vld [vmem:[%s3 + $0x28] sm:$0xf]
    %v153 = vld [vmem:[%s4] sm:$0xff]
    %v154 = vld [vmem:[%s4 + $0x8] sm:$0xff]
    %v155 = vld [vmem:[%s4 + $0x10] sm:$0xff]
    %v156 = vld [vmem:[%s4 + $0x18] sm:$0xff]
    %v157 = vld [vmem:[%s4 + $0x20] sm:$0xff]
    %v158 = vld [vmem:[%s4 + $0x28] sm:$0xf]
    %160 = vset.pattern.permute.xlu0 0
    %161 = vperm.xlu0 %160, %v153
    %v162 = vpop.permute.xlu0 %161
    %165 = vset.pattern.permute.xlu0 0
    %166 = vperm.xlu0 %165, %v154
    %v167 = vpop.permute.xlu0 %166
    %170 = vset.pattern.permute.xlu0 0
    %171 = vperm.xlu0 %170, %v155
    %v172 = vpop.permute.xlu0 %171
    %175 = vset.pattern.permute.xlu0 0
    %176 = vperm.xlu0 %175, %v156
    %v177 = vpop.permute.xlu0 %176
    %180 = vset.pattern.permute.xlu0 0
    %181 = vperm.xlu0 %180, %v157
    %v182 = vpop.permute.xlu0 %181
    %185 = vset.pattern.permute.xlu0 0
    %186 = vperm.xlu0 %185, %v158
    %v187 = vpop.permute.xlu0 %186
    %vm189 = vcmask 179200
    %v191 = vsel %vm189, %v147, 0
    %v194 = vsel %vm189, %v148, 0
    %v197 = vsel %vm189, %v149, 0
    %v200 = vsel %vm189, %v150, 0
    %v203 = vsel %vm189, %v151, 0
    %v206 = vsel %vm189, %v152, 0
    %vm208 = vcmask 1045504
    %v210 = vsel %vm208, %v146, 0
    %212 = vmatprep.subr.mxu0 0.0
    %213 = vmatpush1.msra.mxu0 %v144
    %214 = vmatprep.subr.mxu0 0.0
    %215 = vmatpush1.msra.mxu0 %v145
    %216 = vmatprep.subr.mxu0 0.0
    %217 = vmatpush1.msra.mxu0 %v210
    %218 = vmatprep.subr.mxu0 0.0
    %219 = vmatpush1.msra.mxu0 0.0
    %220 = vmatprep.subr.mxu0 0.0
    %221 = vmatpush1.msra.mxu0 0.0
    %222 = vmatprep.subr.mxu0 0.0
    %223 = vmatpush1.msra.mxu0 0.0
    %224 = vmatprep.subr.mxu0 0.0
    %225 = vmatpush1.msra.mxu0 0.0
    %226 = vmatprep.subr.mxu0 0.0
    %227 = vmatpush1.msra.mxu0 0.0
    %228 = vmatprep.subr.mxu0 0.0
    %229 = vmatpush1.msra.mxu0 0.0
    %230 = vmatprep.subr.mxu0 0.0
    %231 = vmatpush1.msra.mxu0 0.0
    %232 = vmatprep.subr.mxu0 0.0
    %233 = vmatpush1.msra.mxu0 0.0
    %234 = vmatprep.subr.mxu0 0.0
    %235 = vmatpush1.msra.mxu0 0.0
    %236 = vmatprep.subr.mxu0 0.0
    %237 = vmatpush1.msra.mxu0 0.0
    %238 = vmatprep.subr.mxu0 0.0
    %239 = vmatpush1.msra.mxu0 0.0
    %240 = vmatprep.subr.mxu0 0.0
    %241 = vmatpush1.msra.mxu0 0.0
    %242 = vmatprep.subr.mxu0 0.0
    %243 = vmatpush1.msra.mxu0 0.0
    %244 = vmatprep.subr.mxu0 0.0
    %245 = vmatpush1.msra.mxu0 0.0
    %246 = vmatprep.subr.mxu0 0.0
    %247 = vmatpush1.msra.mxu0 0.0
    %248 = vmatprep.subr.mxu0 0.0
    %249 = vmatpush1.msra.mxu0 0.0
    %250 = vmatprep.subr.mxu0 0.0
    %251 = vmatpush1.msra.mxu0 0.0
    %252 = vmatprep.subr.mxu0 0.0
    %253 = vmatpush1.msra.mxu0 0.0
    %254 = vmatprep.subr.mxu0 0.0
    %255 = vmatpush1.msra.mxu0 0.0
    %256 = vmatprep.subr.mxu0 0.0
    %257 = vmatpush1.msra.mxu0 0.0
    %258 = vmatprep.subr.mxu0 0.0
    %259 = vmatpush1.msra.mxu0 0.0
    %260 = vmatprep.subr.mxu0 0.0
    %261 = vmatpush1.msra.mxu0 0.0
    %262 = vmatprep.subr.mxu0 0.0
    %263 = vmatpush1.msra.mxu0 0.0
    %264 = vmatprep.subr.mxu0 0.0
    %265 = vmatpush1.msra.mxu0 0.0
    %266 = vmatprep.subr.mxu0 0.0
    %267 = vmatpush1.msra.mxu0 0.0
    %268 = vmatprep.subr.mxu0 0.0
    %269 = vmatpush1.msra.mxu0 0.0
    %270 = vmatprep.subr.mxu0 0.0
    %271 = vmatpush1.msra.mxu0 0.0
    %272 = vmatprep.subr.mxu0 0.0
    %273 = vmatpush1.msra.mxu0 0.0
    %274 = vmatprep.subr.mxu0 0.0
    %275 = vmatpush1.msra.mxu0 0.0
    %276 = vmatprep.mubr.f32.mxu0 0.0
    %277 = vmatmul.mubr.f32.gmra.mrb[0].mxu0 %v191
    %v278 = vpop.f32.mrb[0].mxu0
    %v279 = vadd.f32 %v162, %v278
    %v280 = vpop.f32.mrb[0].mxu0
    %281 = vmatprep.mubr.f32.mxu0 0.0
    %282 = vmatmul.mubr.f32.gmra.mrb[0].mxu0 %v194
    %v283 = vpop.f32.mrb[0].mxu0
    %v284 = vadd.f32 %v167, %v283
    %v285 = vpop.f32.mrb[0].mxu0
    %286 = vmatprep.mubr.f32.mxu0 0.0
    %287 = vmatmul.mubr.f32.gmra.mrb[0].mxu0 %v197
    %v288 = vpop.f32.mrb[0].mxu0
    %v289 = vadd.f32 %v172, %v288
    %v290 = vpop.f32.mrb[0].mxu0
    %291 = vmatprep.mubr.f32.mxu0 0.0
    %292 = vmatmul.mubr.f32.gmra.mrb[0].mxu0 %v200
    %v293 = vpop.f32.mrb[0].mxu0
    %v294 = vadd.f32 %v177, %v293
    %v295 = vpop.f32.mrb[0].mxu0
    %296 = vmatprep.mubr.f32.mxu0 0.0
    %297 = vmatmul.mubr.f32.gmra.mrb[0].mxu0 %v203
    %v298 = vpop.f32.mrb[0].mxu0
    %v299 = vadd.f32 %v182, %v298
    %v300 = vpop.f32.mrb[0].mxu0
    %301 = vmatprep.mubr.f32.mxu0 0.0
    %302 = vmatmul.mubr.f32.gmra.mrb[0].mxu0 %v206
    %v303 = vpop.f32.mrb[0].mxu0
    %v304 = vadd.f32 %v187, %v303
    %v305 = vpop.f32.mrb[0].mxu0
    %306 = vdwg.mxu0
    %v307 = vtanh.pop %v279
    %v308 = vtanh.pop %v284
    %v309 = vtanh.pop %v289
    %v310 = vtanh.pop %v294
    %v311 = vtanh.pop %v299
    %v312 = vtanh.pop %v304
    %v313 = vld [vmem:[%s5] sm:$0x1]
    %v314 = vld [vmem:[#allocation2] sm:$0x1]
    %316 = vset.pattern.permute.xlu0 0
    %317 = vperm.xlu0 %316, %v314
    %v318 = vpop.permute.xlu0 %317
    %v320 = vlaneseq
    %v321 = vshrl.u32 %v320, 7
    %v322 = vsub.s32 0, %v321
    %v323 = vrot.slane %v318, %v322
    %vm324 = vcmask 359424
    %v326 = vsel %vm324, %v313, 0
    %vm328 = vcmask 1043456
    %v330 = vsel %vm328, %v312, 0
    %332 = vmatprep.subr.mxu0 0.0
    %333 = vmatpush1.msra.mxu0 %v307
    %334 = vmatprep.subr.mxu0 0.0
    %335 = vmatpush1.msra.mxu0 %v308
    %336 = vmatprep.subr.mxu0 0.0
    %337 = vmatpush1.msra.mxu0 %v309
    %338 = vmatprep.subr.mxu0 0.0
    %339 = vmatpush1.msra.mxu0 %v310
    %340 = vmatprep.subr.mxu0 0.0
    %341 = vmatpush1.msra.mxu0 %v311
    %342 = vmatprep.subr.mxu0 0.0
    %343 = vmatpush1.msra.mxu0 %v330
    %344 = vmatprep.subr.mxu0 0.0
    %345 = vmatpush1.msra.mxu0 0.0
    %346 = vmatprep.subr.mxu0 0.0
    %347 = vmatpush1.msra.mxu0 0.0
    %348 = vmatprep.subr.mxu0 0.0
    %349 = vmatpush1.msra.mxu0 0.0
    %350 = vmatprep.subr.mxu0 0.0
    %351 = vmatpush1.msra.mxu0 0.0
    %352 = vmatprep.subr.mxu0 0.0
    %353 = vmatpush1.msra.mxu0 0.0
    %354 = vmatprep.subr.mxu0 0.0
    %355 = vmatpush1.msra.mxu0 0.0
    %356 = vmatprep.subr.mxu0 0.0
    %357 = vmatpush1.msra.mxu0 0.0
    %358 = vmatprep.subr.mxu0 0.0
    %359 = vmatpush1.msra.mxu0 0.0
    %360 = vmatprep.subr.mxu0 0.0
    %361 = vmatpush1.msra.mxu0 0.0
    %362 = vmatprep.subr.mxu0 0.0
    %363 = vmatpush1.msra.mxu0 0.0
    %364 = vmatprep.subr.mxu0 0.0
    %365 = vmatpush1.msra.mxu0 0.0
    %366 = vmatprep.subr.mxu0 0.0
    %367 = vmatpush1.msra.mxu0 0.0
    %368 = vmatprep.subr.mxu0 0.0
    %369 = vmatpush1.msra.mxu0 0.0
    %370 = vmatprep.subr.mxu0 0.0
    %371 = vmatpush1.msra.mxu0 0.0
    %372 = vmatprep.subr.mxu0 0.0
    %373 = vmatpush1.msra.mxu0 0.0
    %374 = vmatprep.subr.mxu0 0.0
    %375 = vmatpush1.msra.mxu0 0.0
    %376 = vmatprep.subr.mxu0 0.0
    %377 = vmatpush1.msra.mxu0 0.0
    %378 = vmatprep.subr.mxu0 0.0
    %379 = vmatpush1.msra.mxu0 0.0
    %380 = vmatprep.subr.mxu0 0.0
    %381 = vmatpush1.msra.mxu0 0.0
    %382 = vmatprep.subr.mxu0 0.0
    %383 = vmatpush1.msra.mxu0 0.0
    %384 = vmatprep.subr.mxu0 0.0
    %385 = vmatpush1.msra.mxu0 0.0
    %386 = vmatprep.subr.mxu0 0.0
    %387 = vmatpush1.msra.mxu0 0.0
    %388 = vmatprep.subr.mxu0 0.0
    %389 = vmatpush1.msra.mxu0 0.0
    %390 = vmatprep.subr.mxu0 0.0
    %391 = vmatpush1.msra.mxu0 0.0
    %392 = vmatprep.subr.mxu0 0.0
    %393 = vmatpush1.msra.mxu0 0.0
    %394 = vmatprep.subr.mxu0 0.0
    %395 = vmatpush1.msra.mxu0 0.0
    %396 = vmatprep.mubr.f32.mxu0 0.0
    %397 = vmatmul.mubr.f32.gmra.mrb[0].mxu0 %v326
    %v398 = vpop.f32.mrb[0].mxu0
    %v399 = vadd.f32 %v323, %v398
    %v400 = vpop.f32.mrb[0].mxu0
    %401 = vdwg.mxu0
    %v402 = vtanh.pop %v399
    %v403 = vadd.f32 %v402, 1.0
    %vm404 = vcmask 57344
    %405 = vst.msk [vmem:[#allocation3] sm:$0x1] %vm404, %v403
    // Predicated region
    $region30: #{tpu_custom_call.1} parent=1 // pred_check
      _
    $region31: #{tpu_custom_call.1} parent=1 // pred_check_branch
      %407 = sbr.rel (0) target = $region33
    $region32: #{tpu_custom_call.1} parent=1 // pred_region
      %s409 = ssub.s32 16, 16
      %410 = vsyncadd [#allocation4], %s409
      %s412 = sshll.u32 [#allocation3], 4
      %s413 = int_to_ptr.vmem [resolvable:$true] %s412
      %415 = dma.vmem_to_hbm [thread:$0]  %s413, 16, %s7, [#allocation4]
    $region33: #{tpu_custom_call.1} parent=1 // pred_fallthru
      _
    // Predicated region
    $region34: #{tpu_custom_call.1} parent=1 // pred_check
      _
    $region35: #{tpu_custom_call.1} parent=1 // pred_check_branch
      %417 = sbr.rel (0) target = $region37
    $region36: #{tpu_custom_call.1} parent=1 // pred_region
      %418 = dma.done [#allocation4], 16
    $region37: #{tpu_custom_call.1} parent=1 // pred_fallthru
      _
    %419 = vsyncpa [#allocation4], 1

</llo_original>
